<compile_context>
chip_gen: v7x
topology: tpu7x:2x2x1
jax: 0.10.0
libtpu: 0.0.40
codegen_flags: <defaults>
</compile_context>

<pallas_src>
import functools
import math

import jax
import jax.numpy as jnp
from jax.experimental import pallas as pl
from jax.experimental.pallas import tpu as pltpu


def make_mha_kernel(n_heads: int, d_head: int, has_out_proj: bool,
                    compute_dtype, block_b: int, Tq: int, Tk: int, d: int):
    """Fused MHA kernel processing a block of `block_b` examples per grid step."""
    scale = 1.0 / math.sqrt(d_head)
    # Approximate (EUP) reciprocal only on the reduced-precision path; exact on f32.
    approx_recip = jnp.dtype(compute_dtype) != jnp.dtype(jnp.float32)

    def _mm(a, b):
        # (M, K) @ (K, N) on the MXU with f32 accumulation.
        return jnp.dot(a, b, preferred_element_type=jnp.float32)

    def kernel(*refs):
        if has_out_proj:
            (xq_ref, xkv_ref,
             wq_ref, bq_ref, wk_ref, bk_ref, wv_ref, bv_ref,
             wo_ref, bo_ref, out_ref) = refs
        else:
            (xq_ref, xkv_ref,
             wq_ref, bq_ref, wk_ref, bk_ref, wv_ref, bv_ref,
             out_ref) = refs
            wo_ref = bo_ref = None

        # Flatten the example block so the projections are single large-M matmuls.
        xq = xq_ref[...].reshape(block_b * Tq, d)    # compute_dtype (cast wrapper-side)
        xkv = xkv_ref[...].reshape(block_b * Tk, d)

        q = _mm(xq, wq_ref[...]) + bq_ref[...]       # (bB*Tq, d) f32
        k = _mm(xkv, wk_ref[...]) + bk_ref[...]      # (bB*Tk, d) f32
        v = _mm(xkv, wv_ref[...]) + bv_ref[...]      # (bB*Tk, d) f32

        # Pre-scale q (cheaper than scaling the (Tq, Tk) score matrix), then cast
        # the dot operands only; softmax math stays f32.
        q3 = (q * scale).reshape(block_b, Tq, d).astype(compute_dtype)
        k3 = k.reshape(block_b, Tk, d).astype(compute_dtype)
        v3 = v.reshape(block_b, Tk, d).astype(compute_dtype)

        ctx_heads = []
        for h in range(n_heads):                     # small, unrolled; batched over bB
            sl = slice(h * d_head, (h + 1) * d_head)
            # scores = (q/sqrt(dh)) @ k^T, batched over the block (trans-B contraction).
            s = jnp.einsum('bqd,bkd->bqk', q3[:, :, sl], k3[:, :, sl],
                           preferred_element_type=jnp.float32)        # (bB,Tq,Tk) f32
            m = jnp.max(s, axis=-1, keepdims=True)
            p = jnp.exp(s - m)
            denom = jnp.sum(p, axis=-1, keepdims=True)
            p = p * pl.reciprocal(denom, approx=approx_recip)          # softmax, f32
            ctx_heads.append(
                jnp.einsum('bqk,bkd->bqd', p.astype(compute_dtype), v3[:, :, sl],
                           preferred_element_type=jnp.float32))        # (bB,Tq,dh) f32

        ctx = ctx_heads[0] if n_heads == 1 else jnp.concatenate(ctx_heads, axis=-1)

        if has_out_proj:
            # One merged K=d output projection on the flattened context block.
            ctx_f = ctx.reshape(block_b * Tq, d).astype(compute_dtype)
            out = _mm(ctx_f, wo_ref[...]) + bo_ref[...]                # (bB*Tq, d) f32
            out = out.reshape(block_b, Tq, d)
        else:
            out = ctx

        out_ref[...] = out.astype(out_ref.dtype)

    return kernel


def _choose_block_b(B, Tq, Tk, d, itemsize, target_rows=512,
                    vmem_budget=24 * 1024 * 1024):
    """Pick examples-per-step: ~target_rows rows of M, under a conservative VMEM
    budget (safe for v7x 64 MiB physical VMEM), keeping >=2 grid steps when B>1."""

    def step_bytes(bb):
        io = 2 * bb * (Tq + Tk) * d * itemsize + 2 * bb * Tq * d * 4   # dbl-buffered I/O
        qkv = bb * (Tq + 2 * Tk) * d * 4                               # f32 q,k,v
        attn = 3 * bb * Tq * Tk * 4                                    # s, p (+slack)
        ctx = 2 * bb * Tq * d * 4                                      # ctx + out
        return io + qkv + attn + ctx

    bb = max(1, min(B, max(1, target_rows // max(Tq, 1))))
    while bb > 1 and step_bytes(bb) > vmem_budget:
        bb = (bb + 1) // 2
    if B > 1 and pl.cdiv(B, bb) < 2:
        bb = pl.cdiv(B, 2)          # keep >=2 steps for megacore sharding (v7x)
    return bb


@functools.partial(jax.jit,
                   static_argnames=("n_heads", "compute_dtype", "target_block_rows"))
def multihead_attention_forward(x_q, x_kv, wq, bq, wk, bk, wv, bv,
                                wo=None, bo=None, *,
                                n_heads: int,
                                compute_dtype=jnp.bfloat16,
                                target_block_rows: int = 512):
    """x_q: (B, Tq, d), x_kv: (B, Tk, d). Weights in PyTorch convention [d_out, d_in]."""
    B, Tq, d = x_q.shape
    _, Tk, _ = x_kv.shape
    assert d % n_heads == 0
    d_head = d // n_heads
    has_out_proj = wo is not None

    itemsize = jnp.dtype(compute_dtype).itemsize
    block_b = _choose_block_b(B, Tq, Tk, d, itemsize, target_block_rows)
    B_pad = pl.cdiv(B, block_b) * block_b
    if B_pad != B:
        # Zero-padding is NaN-safe: zero scores -> uniform softmax; rows sliced off.
        pad = ((0, B_pad - B), (0, 0), (0, 0))
        x_q = jnp.pad(x_q, pad)
        x_kv = jnp.pad(x_kv, pad)
    grid = (B_pad // block_b,)

    # Cast MXU operands once on the wrapper side (halves DMA bytes / VMEM residency
    # when compute_dtype=bf16); biases stay f32 and are added post-accumulation.
    # (For large d, pre-transpose/pre-cast the weights once outside this call.)
    xq_c = x_q.astype(compute_dtype)
    xkv_c = x_kv.astype(compute_dtype)
    params = [wq.T.astype(compute_dtype), bq[None, :].astype(jnp.float32),
              wk.T.astype(compute_dtype), bk[None, :].astype(jnp.float32),
              wv.T.astype(compute_dtype), bv[None, :].astype(jnp.float32)]
    if has_out_proj:
        params += [wo.T.astype(compute_dtype), bo[None, :].astype(jnp.float32)]

    kernel = make_mha_kernel(n_heads, d_head, has_out_proj, compute_dtype,
                             block_b, Tq, Tk, d)

    in_specs = [
        pl.BlockSpec((block_b, Tq, d), lambda b: (b, 0, 0)),
        pl.BlockSpec((block_b, Tk, d), lambda b: (b, 0, 0)),
    ]
    for p in params:
        in_specs.append(pl.BlockSpec(p.shape, lambda b: (0, 0)))   # VMEM-resident
    out_spec = pl.BlockSpec((block_b, Tq, d), lambda b: (b, 0, 0))

    out = pl.pallas_call(
        kernel,
        out_shape=jax.ShapeDtypeStruct((B_pad, Tq, d), jnp.float32),
        grid=grid,
        in_specs=in_specs,
        out_specs=out_spec,
        compiler_params=pltpu.CompilerParams(
            dimension_semantics=("parallel",)),
    )(xq_c, xkv_c, *params)

    return out[:B] if B_pad != B else out


# ---------------------------------------------------------------------------
# Parameter init mimicking the PyTorch module, and a pure-JAX reference.
# ---------------------------------------------------------------------------

def xavier_uniform(key, shape, gain=1.0):
    fan_out, fan_in = shape
    a = gain * math.sqrt(6.0 / (fan_in + fan_out))
    return jax.random.uniform(key, shape, jnp.float32, -a, a)


def linear_default_weight(key, d_out, d_in):
    bound = 1.0 / math.sqrt(d_in)
    return jax.random.uniform(key, (d_out, d_in), jnp.float32, -bound, bound)


def _split_heads(t, n_heads):
    B, T, d = t.shape
    dh = d // n_heads
    return t.reshape(B, T, n_heads, dh).transpose(0, 2, 1, 3).reshape(B * n_heads, T, dh)


def reference_forward(x_q, x_kv, wq, bq, wk, bk, wv, bv, wo, bo, n_heads):
    q = x_q @ wq.T + bq
    k = x_kv @ wk.T + bk
    v = x_kv @ wv.T + bv
    B, Tq, d = q.shape
    dh_k = k.shape[-1] // n_heads
    dh_v = v.shape[-1] // n_heads
    qh = _split_heads(q, n_heads)
    kh = _split_heads(k, n_heads)
    vh = _split_heads(v, n_heads)
    att = jax.nn.softmax(qh @ jnp.swapaxes(kh, 1, 2) / math.sqrt(dh_k), axis=-1)
    x = att @ vh
    x = x.reshape(B, n_heads, Tq, dh_v).transpose(0, 2, 1, 3).reshape(B, Tq, n_heads * dh_v)
    if wo is not None:
        x = x @ wo.T + bo
    return x


if __name__ == "__main__":
    # Small shapes consistent with the module.
    d = 32
    n_heads = 2
    n_q_tokens = 8
    n_kv_tokens = 8
    batch = 2
    dropout = 0.0            # -> dropout branch inactive
    initialization = "xavier"
    # key_compression / value_compression are None in this configuration.
    # TODO(synk): key/value compression (Linear over the token axis) not implemented.

    key = jax.random.PRNGKey(0)
    k_q, k_k, k_v, k_o, k_xq, k_xkv, k_xq2, k_xkv2 = jax.random.split(key, 8)

    gain = 1.0 / math.sqrt(2.0)
    wq = xavier_uniform(k_q, (d, d), gain)
    wk = xavier_uniform(k_k, (d, d), gain)
    wv = xavier_uniform(k_v, (d, d), gain)
    bq = jnp.zeros((d,), jnp.float32)
    bk = jnp.zeros((d,), jnp.float32)
    bv = jnp.zeros((d,), jnp.float32)
    wo = linear_default_weight(k_o, d, d)   # W_out present because n_heads > 1
    bo = jnp.zeros((d,), jnp.float32)       # zero-init bias, as in the module

    x_q = jax.random.normal(k_xq, (batch, n_q_tokens, d), jnp.float32)
    x_kv = jax.random.normal(k_xkv, (batch, n_kv_tokens, d), jnp.float32)

    with jax.default_matmul_precision("float32"):
        ref = reference_forward(x_q, x_kv, wq, bq, wk, bk, wv, bv, wo, bo, n_heads)

    # 1) Performance-default path: bf16 MXU operands, f32 accumulation/softmax.
    out_bf16 = multihead_attention_forward(
        x_q, x_kv, wq, bq, wk, bk, wv, bv, wo, bo,
        n_heads=n_heads, compute_dtype=jnp.bfloat16)
    out_bf16 = jax.block_until_ready(out_bf16)
    assert out_bf16.shape == ref.shape == (batch, n_q_tokens, d)
    assert jnp.allclose(out_bf16, ref, atol=5e-2, rtol=5e-2), \
        float(jnp.max(jnp.abs(out_bf16 - ref)))

    # 2) f32 path: tight numerical check of the kernel math.
    out_f32 = multihead_attention_forward(
        x_q, x_kv, wq, bq, wk, bk, wv, bv, wo, bo,
        n_heads=n_heads, compute_dtype=jnp.float32)
    out_f32 = jax.block_until_ready(out_f32)
    assert jnp.allclose(out_f32, ref, atol=1e-3, rtol=1e-3), \
        float(jnp.max(jnp.abs(out_f32 - ref)))

    # 3) Exercise multi-example blocks + tail padding (B=5 -> block_b=3, padded to 6).
    x_q5 = jax.random.normal(k_xq2, (5, n_q_tokens, d), jnp.float32)
    x_kv5 = jax.random.normal(k_xkv2, (5, n_kv_tokens, d), jnp.float32)
    out5 = multihead_attention_forward(
        x_q5, x_kv5, wq, bq, wk, bk, wv, bv, wo, bo,
        n_heads=n_heads, compute_dtype=jnp.bfloat16)
    out5 = jax.block_until_ready(out5)
    with jax.default_matmul_precision("float32"):
        ref5 = reference_forward(x_q5, x_kv5, wq, bq, wk, bk, wv, bv, wo, bo, n_heads)
    assert out5.shape == ref5.shape == (5, n_q_tokens, d)
    assert jnp.allclose(out5, ref5, atol=5e-2, rtol=5e-2), \
        float(jnp.max(jnp.abs(out5 - ref5)))

    print("KERNEL_OK")
</pallas_src>

<mosaic_0001>
module attributes {stable_mosaic.version = 11 : i64} {
  func.func @kernel(%arg0: i32, %arg1: memref<1x8x32xbf16, #tpu.memory_space<vmem>>, %arg2: memref<1x8x32xbf16, #tpu.memory_space<vmem>>, %arg3: memref<32x32xbf16, #tpu.memory_space<vmem>>, %arg4: memref<1x32xf32, #tpu.memory_space<vmem>>, %arg5: memref<32x32xbf16, #tpu.memory_space<vmem>>, %arg6: memref<1x32xf32, #tpu.memory_space<vmem>>, %arg7: memref<32x32xbf16, #tpu.memory_space<vmem>>, %arg8: memref<1x32xf32, #tpu.memory_space<vmem>>, %arg9: memref<32x32xbf16, #tpu.memory_space<vmem>>, %arg10: memref<1x32xf32, #tpu.memory_space<vmem>>, %arg11: memref<1x8x32xf32, #tpu.memory_space<vmem>>) attributes {dimension_semantics = [#tpu.dimension_semantics<parallel>], iteration_bounds = array<i64: 2>, scalar_prefetch = 0 : i64, scratch_operands = 0 : i64, tpu.core_type = #tpu.core_type<tc>, window_params = [{transform_indices = @transform_0, window_bounds = array<i64: 1, 8, 32>}, {transform_indices = @transform_1, window_bounds = array<i64: 1, 8, 32>}, {pipeline_mode = #tpu.pipeline_mode<synchronous>, transform_indices = @transform_2, window_bounds = array<i64: 32, 32>}, {pipeline_mode = #tpu.pipeline_mode<synchronous>, transform_indices = @transform_3, window_bounds = array<i64: 1, 32>}, {pipeline_mode = #tpu.pipeline_mode<synchronous>, transform_indices = @transform_4, window_bounds = array<i64: 32, 32>}, {pipeline_mode = #tpu.pipeline_mode<synchronous>, transform_indices = @transform_5, window_bounds = array<i64: 1, 32>}, {pipeline_mode = #tpu.pipeline_mode<synchronous>, transform_indices = @transform_6, window_bounds = array<i64: 32, 32>}, {pipeline_mode = #tpu.pipeline_mode<synchronous>, transform_indices = @transform_7, window_bounds = array<i64: 1, 32>}, {pipeline_mode = #tpu.pipeline_mode<synchronous>, transform_indices = @transform_8, window_bounds = array<i64: 32, 32>}, {pipeline_mode = #tpu.pipeline_mode<synchronous>, transform_indices = @transform_9, window_bounds = array<i64: 1, 32>}, {transform_indices = @transform_10, window_bounds = array<i64: 1, 8, 32>}]} {
    %c0 = arith.constant 0 : index
    %c0_0 = arith.constant 0 : index
    %c0_1 = arith.constant 0 : index
    %0 = vector.load %arg1[%c0, %c0_0, %c0_1] : memref<1x8x32xbf16, #tpu.memory_space<vmem>>, vector<1x8x32xbf16>
    %1 = vector.shape_cast %0 : vector<1x8x32xbf16> to vector<8x32xbf16>
    %c0_2 = arith.constant 0 : index
    %c0_3 = arith.constant 0 : index
    %c0_4 = arith.constant 0 : index
    %2 = vector.load %arg2[%c0_2, %c0_3, %c0_4] : memref<1x8x32xbf16, #tpu.memory_space<vmem>>, vector<1x8x32xbf16>
    %3 = vector.shape_cast %2 : vector<1x8x32xbf16> to vector<8x32xbf16>
    %c0_5 = arith.constant 0 : index
    %c0_6 = arith.constant 0 : index
    %4 = vector.load %arg3[%c0_5, %c0_6] : memref<32x32xbf16, #tpu.memory_space<vmem>>, vector<32x32xbf16>
    %cst = arith.constant dense<0.000000e+00> : vector<8x32xf32>
    %5 = tpu.matmul %1, %4, %cst {dimension_numbers = #tpu.dot_dimension_numbers<[1], [0], [0], [1], [0, 0, 1, 1], [], []>} : vector<8x32xbf16>, vector<32x32xbf16>, vector<8x32xf32> -> vector<8x32xf32>
    %c0_7 = arith.constant 0 : index
    %c0_8 = arith.constant 0 : index
    %6 = vector.load %arg4[%c0_7, %c0_8] : memref<1x32xf32, #tpu.memory_space<vmem>>, vector<1x32xf32>
    %7 = vector.broadcast %6 : vector<1x32xf32> to vector<8x32xf32>
    %8 = arith.addf %5, %7 : vector<8x32xf32>
    %c0_9 = arith.constant 0 : index
    %c0_10 = arith.constant 0 : index
    %9 = vector.load %arg5[%c0_9, %c0_10] : memref<32x32xbf16, #tpu.memory_space<vmem>>, vector<32x32xbf16>
    %cst_11 = arith.constant dense<0.000000e+00> : vector<8x32xf32>
    %10 = tpu.matmul %3, %9, %cst_11 {dimension_numbers = #tpu.dot_dimension_numbers<[1], [0], [0], [1], [0, 0, 1, 1], [], []>} : vector<8x32xbf16>, vector<32x32xbf16>, vector<8x32xf32> -> vector<8x32xf32>
    %c0_12 = arith.constant 0 : index
    %c0_13 = arith.constant 0 : index
    %11 = vector.load %arg6[%c0_12, %c0_13] : memref<1x32xf32, #tpu.memory_space<vmem>>, vector<1x32xf32>
    %12 = vector.broadcast %11 : vector<1x32xf32> to vector<8x32xf32>
    %13 = arith.addf %10, %12 : vector<8x32xf32>
    %c0_14 = arith.constant 0 : index
    %c0_15 = arith.constant 0 : index
    %14 = vector.load %arg7[%c0_14, %c0_15] : memref<32x32xbf16, #tpu.memory_space<vmem>>, vector<32x32xbf16>
    %cst_16 = arith.constant dense<0.000000e+00> : vector<8x32xf32>
    %15 = tpu.matmul %3, %14, %cst_16 {dimension_numbers = #tpu.dot_dimension_numbers<[1], [0], [0], [1], [0, 0, 1, 1], [], []>} : vector<8x32xbf16>, vector<32x32xbf16>, vector<8x32xf32> -> vector<8x32xf32>
    %c0_17 = arith.constant 0 : index
    %c0_18 = arith.constant 0 : index
    %16 = vector.load %arg8[%c0_17, %c0_18] : memref<1x32xf32, #tpu.memory_space<vmem>>, vector<1x32xf32>
    %17 = vector.broadcast %16 : vector<1x32xf32> to vector<8x32xf32>
    %18 = arith.addf %15, %17 : vector<8x32xf32>
    %cst_19 = arith.constant 2.500000e-01 : f32
    %19 = vector.broadcast %cst_19 : f32 to vector<8x32xf32>
    %20 = arith.mulf %8, %19 : vector<8x32xf32>
    %21 = vector.shape_cast %20 : vector<8x32xf32> to vector<1x8x32xf32>
    %22 = arith.truncf %21 : vector<1x8x32xf32> to vector<1x8x32xbf16>
    %23 = vector.shape_cast %13 : vector<8x32xf32> to vector<1x8x32xf32>
    %24 = arith.truncf %23 : vector<1x8x32xf32> to vector<1x8x32xbf16>
    %25 = vector.shape_cast %18 : vector<8x32xf32> to vector<1x8x32xf32>
    %26 = arith.truncf %25 : vector<1x8x32xf32> to vector<1x8x32xbf16>
    %27 = vector.extract_strided_slice %22 {offsets = [0, 0, 0], sizes = [1, 8, 16], strides = [1, 1, 1]} : vector<1x8x32xbf16> to vector<1x8x16xbf16>
    %28 = vector.extract_strided_slice %24 {offsets = [0, 0, 0], sizes = [1, 8, 16], strides = [1, 1, 1]} : vector<1x8x32xbf16> to vector<1x8x16xbf16>
    "tpu.trace_start"() <{level = 10 : i32, message = "bqd,bkd->bqk"}> : () -> ()
    %cst_20 = arith.constant dense<0.000000e+00> : vector<1x8x8xf32>
    %29 = tpu.matmul %27, %28, %cst_20 {dimension_numbers = #tpu.dot_dimension_numbers<[2], [2], [1], [1], [0, 0, 0, 1, 1, 1], [0], [0]>} : vector<1x8x16xbf16>, vector<1x8x16xbf16>, vector<1x8x8xf32> -> vector<1x8x8xf32>
    "tpu.trace_stop"() : () -> ()
    %cst_21 = arith.constant dense<0xFF800000> : vector<1x8xf32>
    %30 = vector.multi_reduction <maximumf>, %29, %cst_21 [2] : vector<1x8x8xf32> to vector<1x8xf32>
    %31 = vector.shape_cast %30 : vector<1x8xf32> to vector<1x8x1xf32>
    %32 = vector.broadcast %31 : vector<1x8x1xf32> to vector<1x8x8xf32>
    %33 = arith.subf %29, %32 : vector<1x8x8xf32>
    %34 = math.exp %33 : vector<1x8x8xf32>
    %cst_22 = arith.constant dense<0.000000e+00> : vector<1x8xf32>
    %35 = vector.multi_reduction <add>, %34, %cst_22 [2] : vector<1x8x8xf32> to vector<1x8xf32>
    %36 = vector.shape_cast %35 : vector<1x8xf32> to vector<1x8x1xf32>
    %37 = tpu.reciprocal %36 {approx = true} : vector<1x8x1xf32> -> vector<1x8x1xf32>
    %38 = vector.broadcast %37 : vector<1x8x1xf32> to vector<1x8x8xf32>
    %39 = arith.mulf %34, %38 : vector<1x8x8xf32>
    %40 = arith.truncf %39 : vector<1x8x8xf32> to vector<1x8x8xbf16>
    %41 = vector.extract_strided_slice %26 {offsets = [0, 0, 0], sizes = [1, 8, 16], strides = [1, 1, 1]} : vector<1x8x32xbf16> to vector<1x8x16xbf16>
    "tpu.trace_start"() <{level = 10 : i32, message = "bqk,bkd->bqd"}> : () -> ()
    %cst_23 = arith.constant dense<0.000000e+00> : vector<1x8x16xf32>
    %42 = tpu.matmul %40, %41, %cst_23 {dimension_numbers = #tpu.dot_dimension_numbers<[2], [1], [1], [2], [0, 0, 0, 1, 1, 2], [0], [0]>} : vector<1x8x8xbf16>, vector<1x8x16xbf16>, vector<1x8x16xf32> -> vector<1x8x16xf32>
    "tpu.trace_stop"() : () -> ()
    %43 = vector.extract_strided_slice %22 {offsets = [0, 0, 16], sizes = [1, 8, 16], strides = [1, 1, 1]} : vector<1x8x32xbf16> to vector<1x8x16xbf16>
    %44 = vector.extract_strided_slice %24 {offsets = [0, 0, 16], sizes = [1, 8, 16], strides = [1, 1, 1]} : vector<1x8x32xbf16> to vector<1x8x16xbf16>
    "tpu.trace_start"() <{level = 10 : i32, message = "bqd,bkd->bqk"}> : () -> ()
    %cst_24 = arith.constant dense<0.000000e+00> : vector<1x8x8xf32>
    %45 = tpu.matmul %43, %44, %cst_24 {dimension_numbers = #tpu.dot_dimension_numbers<[2], [2], [1], [1], [0, 0, 0, 1, 1, 1], [0], [0]>} : vector<1x8x16xbf16>, vector<1x8x16xbf16>, vector<1x8x8xf32> -> vector<1x8x8xf32>
    "tpu.trace_stop"() : () -> ()
    %cst_25 = arith.constant dense<0xFF800000> : vector<1x8xf32>
    %46 = vector.multi_reduction <maximumf>, %45, %cst_25 [2] : vector<1x8x8xf32> to vector<1x8xf32>
    %47 = vector.shape_cast %46 : vector<1x8xf32> to vector<1x8x1xf32>
    %48 = vector.broadcast %47 : vector<1x8x1xf32> to vector<1x8x8xf32>
    %49 = arith.subf %45, %48 : vector<1x8x8xf32>
    %50 = math.exp %49 : vector<1x8x8xf32>
    %cst_26 = arith.constant dense<0.000000e+00> : vector<1x8xf32>
    %51 = vector.multi_reduction <add>, %50, %cst_26 [2] : vector<1x8x8xf32> to vector<1x8xf32>
    %52 = vector.shape_cast %51 : vector<1x8xf32> to vector<1x8x1xf32>
    %53 = tpu.reciprocal %52 {approx = true} : vector<1x8x1xf32> -> vector<1x8x1xf32>
    %54 = vector.broadcast %53 : vector<1x8x1xf32> to vector<1x8x8xf32>
    %55 = arith.mulf %50, %54 : vector<1x8x8xf32>
    %56 = arith.truncf %55 : vector<1x8x8xf32> to vector<1x8x8xbf16>
    %57 = vector.extract_strided_slice %26 {offsets = [0, 0, 16], sizes = [1, 8, 16], strides = [1, 1, 1]} : vector<1x8x32xbf16> to vector<1x8x16xbf16>
    "tpu.trace_start"() <{level = 10 : i32, message = "bqk,bkd->bqd"}> : () -> ()
    %cst_27 = arith.constant dense<0.000000e+00> : vector<1x8x16xf32>
    %58 = tpu.matmul %56, %57, %cst_27 {dimension_numbers = #tpu.dot_dimension_numbers<[2], [1], [1], [2], [0, 0, 0, 1, 1, 2], [0], [0]>} : vector<1x8x8xbf16>, vector<1x8x16xbf16>, vector<1x8x16xf32> -> vector<1x8x16xf32>
    "tpu.trace_stop"() : () -> ()
    %59 = tpu.concatenate %42, %58 in 2 : vector<1x8x16xf32>, vector<1x8x16xf32> -> vector<1x8x32xf32>
    %60 = vector.shape_cast %59 : vector<1x8x32xf32> to vector<8x32xf32>
    %61 = arith.truncf %60 : vector<8x32xf32> to vector<8x32xbf16>
    %c0_28 = arith.constant 0 : index
    %c0_29 = arith.constant 0 : index
    %62 = vector.load %arg9[%c0_28, %c0_29] : memref<32x32xbf16, #tpu.memory_space<vmem>>, vector<32x32xbf16>
    %cst_30 = arith.constant dense<0.000000e+00> : vector<8x32xf32>
    %63 = tpu.matmul %61, %62, %cst_30 {dimension_numbers = #tpu.dot_dimension_numbers<[1], [0], [0], [1], [0, 0, 1, 1], [], []>} : vector<8x32xbf16>, vector<32x32xbf16>, vector<8x32xf32> -> vector<8x32xf32>
    %c0_31 = arith.constant 0 : index
    %c0_32 = arith.constant 0 : index
    %64 = vector.load %arg10[%c0_31, %c0_32] : memref<1x32xf32, #tpu.memory_space<vmem>>, vector<1x32xf32>
    %65 = vector.broadcast %64 : vector<1x32xf32> to vector<8x32xf32>
    %66 = arith.addf %63, %65 : vector<8x32xf32>
    %67 = vector.shape_cast %66 : vector<8x32xf32> to vector<1x8x32xf32>
    %c0_33 = arith.constant 0 : index
    %c0_34 = arith.constant 0 : index
    %c0_35 = arith.constant 0 : index
    %68 = vector.load %arg11[%c0_33, %c0_34, %c0_35] : memref<1x8x32xf32, #tpu.memory_space<vmem>>, vector<1x8x32xf32>
    tpu.vector_store %arg11[%c0_33, %c0_34, %c0_35], %67 {strides = array<i32>} : memref<1x8x32xf32, #tpu.memory_space<vmem>>, vector<1x8x32xf32>,
    return
  }
  func.func @transform_0(%arg0: i32) -> (i32, i32, i32) {
    %c0_i32 = arith.constant 0 : i32
    %c0_i32_0 = arith.constant 0 : i32
    %c0_i32_1 = arith.constant 0 : i32
    return %arg0, %c0_i32, %c0_i32_0 : i32, i32, i32
  }
  func.func @transform_1(%arg0: i32) -> (i32, i32, i32) {
    %c0_i32 = arith.constant 0 : i32
    %c0_i32_0 = arith.constant 0 : i32
    %c0_i32_1 = arith.constant 0 : i32
    return %arg0, %c0_i32, %c0_i32_0 : i32, i32, i32
  }
  func.func @transform_2(%arg0: i32) -> (i32, i32) {
    %c0_i32 = arith.constant 0 : i32
    %c0_i32_0 = arith.constant 0 : i32
    %c0_i32_1 = arith.constant 0 : i32
    return %c0_i32, %c0_i32_0 : i32, i32
  }
  func.func @transform_3(%arg0: i32) -> (i32, i32) {
    %c0_i32 = arith.constant 0 : i32
    %c0_i32_0 = arith.constant 0 : i32
    %c0_i32_1 = arith.constant 0 : i32
    return %c0_i32, %c0_i32_0 : i32, i32
  }
  func.func @transform_4(%arg0: i32) -> (i32, i32) {
    %c0_i32 = arith.constant 0 : i32
    %c0_i32_0 = arith.constant 0 : i32
    %c0_i32_1 = arith.constant 0 : i32
    return %c0_i32, %c0_i32_0 : i32, i32
  }
  func.func @transform_5(%arg0: i32) -> (i32, i32) {
    %c0_i32 = arith.constant 0 : i32
    %c0_i32_0 = arith.constant 0 : i32
    %c0_i32_1 = arith.constant 0 : i32
    return %c0_i32, %c0_i32_0 : i32, i32
  }
  func.func @transform_6(%arg0: i32) -> (i32, i32) {
    %c0_i32 = arith.constant 0 : i32
    %c0_i32_0 = arith.constant 0 : i32
    %c0_i32_1 = arith.constant 0 : i32
    return %c0_i32, %c0_i32_0 : i32, i32
  }
  func.func @transform_7(%arg0: i32) -> (i32, i32) {
    %c0_i32 = arith.constant 0 : i32
    %c0_i32_0 = arith.constant 0 : i32
    %c0_i32_1 = arith.constant 0 : i32
    return %c0_i32, %c0_i32_0 : i32, i32
  }
  func.func @transform_8(%arg0: i32) -> (i32, i32) {
    %c0_i32 = arith.constant 0 : i32
    %c0_i32_0 = arith.constant 0 : i32
    %c0_i32_1 = arith.constant 0 : i32
    return %c0_i32, %c0_i32_0 : i32, i32
  }
  func.func @transform_9(%arg0: i32) -> (i32, i32) {
    %c0_i32 = arith.constant 0 : i32
    %c0_i32_0 = arith.constant 0 : i32
    %c0_i32_1 = arith.constant 0 : i32
    return %c0_i32, %c0_i32_0 : i32, i32
  }
  func.func @transform_10(%arg0: i32) -> (i32, i32, i32) {
    %c0_i32 = arith.constant 0 : i32
    %c0_i32_0 = arith.constant 0 : i32
    %c0_i32_1 = arith.constant 0 : i32
    return %arg0, %c0_i32, %c0_i32_0 : i32, i32, i32
  }
}

</mosaic_0001>

<llo_original>
// kernel: multihead_attention_forward.1
$region0: #{multihead_attention_forward.1}
  #allocation0 [shape = 'u32[]', space=smem, size = 0x4, offset = 0x4, fixed_abs, tag = 'smem constant byte address 0x4 - core index']
  #allocation1 [shape = 'u32[144,128]{1,0:T(1,128)}', space=vmem, size = 0x12000, scoped, tag = 'internal scratch']
  %s0 = inlined_call_operand.vmem [shape: bf16[2,8,32], index: 0, kind: input, shape index: {}]
  %s1 = inlined_call_operand.vmem [shape: bf16[2,8,32], index: 1, kind: input, shape index: {}]
  %s2 = inlined_call_operand.vmem [shape: bf16[32,32], index: 2, kind: input, shape index: {}]
  %s3 = inlined_call_operand.vmem [shape: f32[1,32], index: 3, kind: input, shape index: {}]
  %s4 = inlined_call_operand.vmem [shape: bf16[32,32], index: 4, kind: input, shape index: {}]
  %s5 = inlined_call_operand.vmem [shape: f32[1,32], index: 5, kind: input, shape index: {}]
  %s6 = inlined_call_operand.vmem [shape: bf16[32,32], index: 6, kind: input, shape index: {}]
  %s7 = inlined_call_operand.vmem [shape: f32[1,32], index: 7, kind: input, shape index: {}]
  %s8 = inlined_call_operand.vmem [shape: bf16[32,32], index: 8, kind: input, shape index: {}]
  %s9 = inlined_call_operand.vmem [shape: f32[1,32], index: 9, kind: input, shape index: {}]
  %s10 = inlined_call_operand.hbm [shape: f32[2,8,32], index: 10, kind: output, shape index: {}]
  %s11 = sld [smem:[#allocation0]]
  $region73: #{multihead_attention_forward.1} parent=0
    _
  %s13 = ssub.s32 1, %s11
  %s14 = scalar_select 0, %s13, %s11
  $region1: #{multihead_attention_forward.1} parent=0
    #allocation2 [shape = 'u8[8192]{0}', space=vmem, size = 0x2000, scoped, tag = 'output window, operand 0']
    #allocation3 [shape = 's32[2]{0}', space=sflag, size = 0x8, scoped, tag = 'scoped memory for multihead_attention_forward.1']
    %15 = vsyncpa [#allocation3], 0
    %s16 = scalar_lea.sflag [#allocation3], 1
    %17 = vsyncpa %s16, 0
    loop: start=0, step=1, limit=4
    $region2: #{multihead_attention_forward.1} parent=1 // loop_pre_header
      _
    $region3: #{multihead_attention_forward.1} parent=1 // loop_header
      %s19 = sphi 0, %s23
      %p20 = scmp.ge.s32.totalorder %s19, 4
      %s29 = sphi 0, %s31
      %s32 = sphi 0, %s29
      %s33 = sphi 0, %s32
      %s49 = sphi 0, %s33
      %s55 = sphi 0, %s57
      %s58 = sphi 0, %s55
      %s59 = sphi 0, %s58
      %s75 = sphi 0, %s59
      %s79 = sphi 0, %s79
      %s81 = sphi 0, %s79
      %s82 = sphi 0, %s81
      %s96 = sphi 0, %s82
      %s100 = sphi 0, %s100
      %s102 = sphi 0, %s100
      %s103 = sphi 0, %s102
      %s117 = sphi 0, %s103
      %s121 = sphi 0, %s121
      %s123 = sphi 0, %s121
      %s124 = sphi 0, %s123
      %s138 = sphi 0, %s124
      %s142 = sphi 0, %s142
      %s144 = sphi 0, %s142
      %s145 = sphi 0, %s144
      %s159 = sphi 0, %s145
      %s163 = sphi 0, %s163
      %s165 = sphi 0, %s163
      %s166 = sphi 0, %s165
      %s180 = sphi 0, %s166
      %s184 = sphi 0, %s184
      %s186 = sphi 0, %s184
      %s187 = sphi 0, %s186
      %s201 = sphi 0, %s187
      %s205 = sphi 0, %s205
      %s207 = sphi 0, %s205
      %s208 = sphi 0, %s207
      %s222 = sphi 0, %s208
      %s226 = sphi 0, %s226
      %s228 = sphi 0, %s226
      %s229 = sphi 0, %s228
      %s243 = sphi 0, %s229
      %s249 = sphi 0, %s251
      %s252 = sphi 0, %s249
      %s253 = sphi 0, %s252
      %s269 = sphi 0, %s253
    $region4: #{multihead_attention_forward.1} parent=1 // loop_header_branch
      %22 = sbr.rel (%p20) target = $region8
    $region5: #{multihead_attention_forward.1} parent=1 // loop_body
      %s24 = ssub.s32 %s19, 1
      %s25 = ssub.s32 %s19, 2
      %s26 = sadd.s32 %s19, 1
      %s27 = ssub.s32 %s19, %s26
      %p28 = scmp.eq.s32.totalorder %s27, 0
      %s30 = sadd.s32 %s29, 1
      %s31 = scalar_select %p28, %s29, %s30
      %p34 = pneg %p28
      %p35 = scmp.eq.s32.totalorder %s19, 1
      %p36 = por %p34, %p35
      %p37 = scmp.ne.s32.totalorder %s29, %s32
      %p38 = scmp.eq.s32.totalorder %s19, 0
      %p39 = por %p37, %p38
      %p40 = scmp.ne.s32.totalorder %s29, %s32
      %p41 = scmp.eq.s32.totalorder %s24, 1
      %p42 = por %p40, %p41
      %p43 = scmp.ne.s32.totalorder %s32, %s33
      %p44 = scmp.eq.s32.totalorder %s24, 0
      %p45 = por %p43, %p44
      %p46 = scmp.ne.s32.totalorder %s32, %s33
      %p47 = scmp.eq.s32.totalorder %s25, 1
      %p48 = por %p46, %p47
      %p50 = scmp.ne.s32.totalorder %s33, %s49
      %p51 = scmp.eq.s32.totalorder %s25, 0
      %p52 = por %p50, %p51
      %s53 = ssub.s32 %s19, %s26
      %p54 = scmp.eq.s32.totalorder %s53, 0
      %s56 = sadd.s32 %s55, 1
      %s57 = scalar_select %p54, %s55, %s56
      %p60 = pneg %p54
      %p61 = scmp.eq.s32.totalorder %s19, 1
      %p62 = por %p60, %p61
      %p63 = scmp.ne.s32.totalorder %s55, %s58
      %p64 = scmp.eq.s32.totalorder %s19, 0
      %p65 = por %p63, %p64
      %p66 = scmp.ne.s32.totalorder %s55, %s58
      %p67 = scmp.eq.s32.totalorder %s24, 1
      %p68 = por %p66, %p67
      %p69 = scmp.ne.s32.totalorder %s58, %s59
      %p70 = scmp.eq.s32.totalorder %s24, 0
      %p71 = por %p69, %p70
      %p72 = scmp.ne.s32.totalorder %s58, %s59
      %p73 = scmp.eq.s32.totalorder %s25, 1
      %p74 = por %p72, %p73
      %p76 = scmp.ne.s32.totalorder %s59, %s75
      %p77 = scmp.eq.s32.totalorder %s25, 0
      %p78 = por %p76, %p77
      %s80 = sadd.s32 %s79, 1
      %p83 = scmp.eq.s32.totalorder %s19, 1
      %p84 = scmp.ne.s32.totalorder %s79, %s81
      %p85 = scmp.eq.s32.totalorder %s19, 0
      %p86 = por %p84, %p85
      %p87 = scmp.ne.s32.totalorder %s79, %s81
      %p88 = scmp.eq.s32.totalorder %s24, 1
      %p89 = por %p87, %p88
      %p90 = scmp.ne.s32.totalorder %s81, %s82
      %p91 = scmp.eq.s32.totalorder %s24, 0
      %p92 = por %p90, %p91
      %p93 = scmp.ne.s32.totalorder %s81, %s82
      %p94 = scmp.eq.s32.totalorder %s25, 1
      %p95 = por %p93, %p94
      %p97 = scmp.ne.s32.totalorder %s82, %s96
      %p98 = scmp.eq.s32.totalorder %s25, 0
      %p99 = por %p97, %p98
      %s101 = sadd.s32 %s100, 1
      %p104 = scmp.eq.s32.totalorder %s19, 1
      %p105 = scmp.ne.s32.totalorder %s100, %s102
      %p106 = scmp.eq.s32.totalorder %s19, 0
      %p107 = por %p105, %p106
      %p108 = scmp.ne.s32.totalorder %s100, %s102
      %p109 = scmp.eq.s32.totalorder %s24, 1
      %p110 = por %p108, %p109
      %p111 = scmp.ne.s32.totalorder %s102, %s103
      %p112 = scmp.eq.s32.totalorder %s24, 0
      %p113 = por %p111, %p112
      %p114 = scmp.ne.s32.totalorder %s102, %s103
      %p115 = scmp.eq.s32.totalorder %s25, 1
      %p116 = por %p114, %p115
      %p118 = scmp.ne.s32.totalorder %s103, %s117
      %p119 = scmp.eq.s32.totalorder %s25, 0
      %p120 = por %p118, %p119
      %s122 = sadd.s32 %s121, 1
      %p125 = scmp.eq.s32.totalorder %s19, 1
      %p126 = scmp.ne.s32.totalorder %s121, %s123
      %p127 = scmp.eq.s32.totalorder %s19, 0
      %p128 = por %p126, %p127
      %p129 = scmp.ne.s32.totalorder %s121, %s123
      %p130 = scmp.eq.s32.totalorder %s24, 1
      %p131 = por %p129, %p130
      %p132 = scmp.ne.s32.totalorder %s123, %s124
      %p133 = scmp.eq.s32.totalorder %s24, 0
      %p134 = por %p132, %p133
      %p135 = scmp.ne.s32.totalorder %s123, %s124
      %p136 = scmp.eq.s32.totalorder %s25, 1
      %p137 = por %p135, %p136
      %p139 = scmp.ne.s32.totalorder %s124, %s138
      %p140 = scmp.eq.s32.totalorder %s25, 0
      %p141 = por %p139, %p140
      %s143 = sadd.s32 %s142, 1
      %p146 = scmp.eq.s32.totalorder %s19, 1
      %p147 = scmp.ne.s32.totalorder %s142, %s144
      %p148 = scmp.eq.s32.totalorder %s19, 0
      %p149 = por %p147, %p148
      %p150 = scmp.ne.s32.totalorder %s142, %s144
      %p151 = scmp.eq.s32.totalorder %s24, 1
      %p152 = por %p150, %p151
      %p153 = scmp.ne.s32.totalorder %s144, %s145
      %p154 = scmp.eq.s32.totalorder %s24, 0
      %p155 = por %p153, %p154
      %p156 = scmp.ne.s32.totalorder %s144, %s145
      %p157 = scmp.eq.s32.totalorder %s25, 1
      %p158 = por %p156, %p157
      %p160 = scmp.ne.s32.totalorder %s145, %s159
      %p161 = scmp.eq.s32.totalorder %s25, 0
      %p162 = por %p160, %p161
      %s164 = sadd.s32 %s163, 1
      %p167 = scmp.eq.s32.totalorder %s19, 1
      %p168 = scmp.ne.s32.totalorder %s163, %s165
      %p169 = scmp.eq.s32.totalorder %s19, 0
      %p170 = por %p168, %p169
      %p171 = scmp.ne.s32.totalorder %s163, %s165
      %p172 = scmp.eq.s32.totalorder %s24, 1
      %p173 = por %p171, %p172
      %p174 = scmp.ne.s32.totalorder %s165, %s166
      %p175 = scmp.eq.s32.totalorder %s24, 0
      %p176 = por %p174, %p175
      %p177 = scmp.ne.s32.totalorder %s165, %s166
      %p178 = scmp.eq.s32.totalorder %s25, 1
      %p179 = por %p177, %p178
      %p181 = scmp.ne.s32.totalorder %s166, %s180
      %p182 = scmp.eq.s32.totalorder %s25, 0
      %p183 = por %p181, %p182
      %s185 = sadd.s32 %s184, 1
      %p188 = scmp.eq.s32.totalorder %s19, 1
      %p189 = scmp.ne.s32.totalorder %s184, %s186
      %p190 = scmp.eq.s32.totalorder %s19, 0
      %p191 = por %p189, %p190
      %p192 = scmp.ne.s32.totalorder %s184, %s186
      %p193 = scmp.eq.s32.totalorder %s24, 1
      %p194 = por %p192, %p193
      %p195 = scmp.ne.s32.totalorder %s186, %s187
      %p196 = scmp.eq.s32.totalorder %s24, 0
      %p197 = por %p195, %p196
      %p198 = scmp.ne.s32.totalorder %s186, %s187
      %p199 = scmp.eq.s32.totalorder %s25, 1
      %p200 = por %p198, %p199
      %p202 = scmp.ne.s32.totalorder %s187, %s201
      %p203 = scmp.eq.s32.totalorder %s25, 0
      %p204 = por %p202, %p203
      %s206 = sadd.s32 %s205, 1
      %p209 = scmp.eq.s32.totalorder %s19, 1
      %p210 = scmp.ne.s32.totalorder %s205, %s207
      %p211 = scmp.eq.s32.totalorder %s19, 0
      %p212 = por %p210, %p211
      %p213 = scmp.ne.s32.totalorder %s205, %s207
      %p214 = scmp.eq.s32.totalorder %s24, 1
      %p215 = por %p213, %p214
      %p216 = scmp.ne.s32.totalorder %s207, %s208
      %p217 = scmp.eq.s32.totalorder %s24, 0
      %p218 = por %p216, %p217
      %p219 = scmp.ne.s32.totalorder %s207, %s208
      %p220 = scmp.eq.s32.totalorder %s25, 1
      %p221 = por %p219, %p220
      %p223 = scmp.ne.s32.totalorder %s208, %s222
      %p224 = scmp.eq.s32.totalorder %s25, 0
      %p225 = por %p223, %p224
      %s227 = sadd.s32 %s226, 1
      %p230 = scmp.eq.s32.totalorder %s19, 1
      %p231 = scmp.ne.s32.totalorder %s226, %s228
      %p232 = scmp.eq.s32.totalorder %s19, 0
      %p233 = por %p231, %p232
      %p234 = scmp.ne.s32.totalorder %s226, %s228
      %p235 = scmp.eq.s32.totalorder %s24, 1
      %p236 = por %p234, %p235
      %p237 = scmp.ne.s32.totalorder %s228, %s229
      %p238 = scmp.eq.s32.totalorder %s24, 0
      %p239 = por %p237, %p238
      %p240 = scmp.ne.s32.totalorder %s228, %s229
      %p241 = scmp.eq.s32.totalorder %s25, 1
      %p242 = por %p240, %p241
      %p244 = scmp.ne.s32.totalorder %s229, %s243
      %p245 = scmp.eq.s32.totalorder %s25, 0
      %p246 = por %p244, %p245
      %s247 = ssub.s32 %s19, %s26
      %p248 = scmp.eq.s32.totalorder %s247, 0
      %s250 = sadd.s32 %s249, 1
      %s251 = scalar_select %p248, %s249, %s250
      %p254 = pneg %p248
      %p255 = scmp.eq.s32.totalorder %s19, 1
      %p256 = por %p254, %p255
      %p257 = scmp.ne.s32.totalorder %s249, %s252
      %p258 = scmp.eq.s32.totalorder %s19, 0
      %p259 = por %p257, %p258
      %p260 = scmp.ne.s32.totalorder %s249, %s252
      %p261 = scmp.eq.s32.totalorder %s24, 1
      %p262 = por %p260, %p261
      %p263 = scmp.ne.s32.totalorder %s252, %s253
      %p264 = scmp.eq.s32.totalorder %s24, 0
      %p265 = por %p263, %p264
      %p266 = scmp.ne.s32.totalorder %s252, %s253
      %p267 = scmp.eq.s32.totalorder %s25, 1
      %p268 = por %p266, %p267
      %p270 = scmp.ne.s32.totalorder %s253, %s269
      %p271 = scmp.eq.s32.totalorder %s25, 0
      %p272 = por %p270, %p271
      %p273 = scmp.le.s32.totalorder 1, %s19
      %p274 = scmp.lt.s32.totalorder %s19, 3
      %p275 = pnand %p273, %p274
      %p276 = pneg %p275
      // Predicated region
      $region9: #{multihead_attention_forward.1} parent=5 // pred_check
        _
      $region10: #{multihead_attention_forward.1} parent=5 // pred_check_branch
        %278 = sbr.rel (%p275) target = $region12
      $region11: #{multihead_attention_forward.1} parent=5 // pred_region
        %s279 = ssub.s32 %s19, 1
        // Predicated region
        $region13: #{multihead_attention_forward.1} parent=11 // pred_check
          %p280 = pneg %p92
        $region14: #{multihead_attention_forward.1} parent=11 // pred_check_branch
          %282 = sbr.rel (%p280) target = $region16
        $region15: #{multihead_attention_forward.1} parent=11 // pred_region
          _
        $region16: #{multihead_attention_forward.1} parent=11 // pred_fallthru
          _
        // Predicated region
        $region17: #{multihead_attention_forward.1} parent=11 // pred_check
          %p283 = pneg %p113
        $region18: #{multihead_attention_forward.1} parent=11 // pred_check_branch
          %285 = sbr.rel (%p283) target = $region20
        $region19: #{multihead_attention_forward.1} parent=11 // pred_region
          _
        $region20: #{multihead_attention_forward.1} parent=11 // pred_fallthru
          _
        // Predicated region
        $region21: #{multihead_attention_forward.1} parent=11 // pred_check
          %p286 = pneg %p134
        $region22: #{multihead_attention_forward.1} parent=11 // pred_check_branch
          %288 = sbr.rel (%p286) target = $region24
        $region23: #{multihead_attention_forward.1} parent=11 // pred_region
          _
        $region24: #{multihead_attention_forward.1} parent=11 // pred_fallthru
          _
        // Predicated region
        $region25: #{multihead_attention_forward.1} parent=11 // pred_check
          %p289 = pneg %p155
        $region26: #{multihead_attention_forward.1} parent=11 // pred_check_branch
          %291 = sbr.rel (%p289) target = $region28
        $region27: #{multihead_attention_forward.1} parent=11 // pred_region
          _
        $region28: #{multihead_attention_forward.1} parent=11 // pred_fallthru
          _
        // Predicated region
        $region29: #{multihead_attention_forward.1} parent=11 // pred_check
          %p292 = pneg %p176
        $region30: #{multihead_attention_forward.1} parent=11 // pred_check_branch
          %294 = sbr.rel (%p292) target = $region32
        $region31: #{multihead_attention_forward.1} parent=11 // pred_region
          _
        $region32: #{multihead_attention_forward.1} parent=11 // pred_fallthru
          _
        // Predicated region
        $region33: #{multihead_attention_forward.1} parent=11 // pred_check
          %p295 = pneg %p197
        $region34: #{multihead_attention_forward.1} parent=11 // pred_check_branch
          %297 = sbr.rel (%p295) target = $region36
        $region35: #{multihead_attention_forward.1} parent=11 // pred_region
          _
        $region36: #{multihead_attention_forward.1} parent=11 // pred_fallthru
          _
        // Predicated region
        $region37: #{multihead_attention_forward.1} parent=11 // pred_check
          %p298 = pneg %p218
        $region38: #{multihead_attention_forward.1} parent=11 // pred_check_branch
          %300 = sbr.rel (%p298) target = $region40
        $region39: #{multihead_attention_forward.1} parent=11 // pred_region
          _
        $region40: #{multihead_attention_forward.1} parent=11 // pred_fallthru
          _
        // Predicated region
        $region41: #{multihead_attention_forward.1} parent=11 // pred_check
          %p301 = pneg %p239
        $region42: #{multihead_attention_forward.1} parent=11 // pred_check_branch
          %303 = sbr.rel (%p301) target = $region44
        $region43: #{multihead_attention_forward.1} parent=11 // pred_region
          _
        $region44: #{multihead_attention_forward.1} parent=11 // pred_fallthru
          _
      $region12: #{multihead_attention_forward.1} parent=5 // pred_fallthru
        _
      %p304 = scmp.lt.s32.totalorder %s19, 2
      // Predicated region
      $region45: #{multihead_attention_forward.1} parent=5 // pred_check
        %p305 = pneg %p304
      $region46: #{multihead_attention_forward.1} parent=5 // pred_check_branch
        %307 = sbr.rel (%p305) target = $region48
      $region47: #{multihead_attention_forward.1} parent=5 // pred_region
        // Predicated region
        $region49: #{multihead_attention_forward.1} parent=47 // pred_check
          %p308 = pneg %p39
        $region50: #{multihead_attention_forward.1} parent=47 // pred_check_branch
          %310 = sbr.rel (%p308) target = $region52
        $region51: #{multihead_attention_forward.1} parent=47 // pred_region
          %p311 = scmp.lt.s32.totalorder %s19, 1
          %s312 = scalar_select %p311, %s19, 1
          %s313 = smul.addr %s312, 4
          %s314 = scalar_lea.vmem %s0, %s313
        $region52: #{multihead_attention_forward.1} parent=47 // pred_fallthru
          _
        // Predicated region
        $region53: #{multihead_attention_forward.1} parent=47 // pred_check
          %p315 = pneg %p65
        $region54: #{multihead_attention_forward.1} parent=47 // pred_check_branch
          %317 = sbr.rel (%p315) target = $region56
        $region55: #{multihead_attention_forward.1} parent=47 // pred_region
          %p318 = scmp.lt.s32.totalorder %s19, 1
          %s319 = scalar_select %p318, %s19, 1
          %s320 = smul.addr %s319, 4
          %s321 = scalar_lea.vmem %s1, %s320
        $region56: #{multihead_attention_forward.1} parent=47 // pred_fallthru
          _
      $region48: #{multihead_attention_forward.1} parent=5 // pred_fallthru
        _
      %p322 = scmp.le.s32.totalorder 1, %s19
      %p323 = scmp.lt.s32.totalorder %s19, 3
      %p324 = pnand %p322, %p323
      %p325 = pneg %p324
      // Predicated region
      $region57: #{multihead_attention_forward.1} parent=5 // pred_check
        _
      $region58: #{multihead_attention_forward.1} parent=5 // pred_check_branch
        %327 = sbr.rel (%p324) target = $region60
      $region59: #{multihead_attention_forward.1} parent=5 // pred_region
        %s328 = ssub.s32 %s19, 1
        %p329 = scmp.lt.s32.totalorder %s24, 1
        %s330 = scalar_select %p329, %s24, 1
        %s331 = smul.addr %s330, 4
        %s332 = scalar_lea.vmem %s0, %s331
        %p333 = pneg %p45
        %p334 = pneg %p42
        %p335 = scmp.lt.s32.totalorder %s24, 1
        %s336 = scalar_select %p335, %s24, 1
        %s337 = smul.addr %s336, 4
        %s338 = scalar_lea.vmem %s1, %s337
        %p339 = pneg %p71
        %p340 = pneg %p68
        %p341 = pneg %p92
        %p342 = pneg %p89
        %p343 = pneg %p113
        %p344 = pneg %p110
        %p345 = pneg %p134
        %p346 = pneg %p131
        %p347 = pneg %p155
        %p348 = pneg %p152
        %p349 = pneg %p176
        %p350 = pneg %p173
        %p351 = pneg %p197
        %p352 = pneg %p194
        %p353 = pneg %p218
        %p354 = pneg %p215
        %p355 = pneg %p239
        %p356 = pneg %p236
        %p357 = pneg %p265
        %p358 = pneg %p262
        %s359 = sand.u32 %s252, 1
        %s360 = scalar_lea.sflag [#allocation3], %s359
        %s361 = sand.u32 %s252, 1
        %s362 = smul.addr %s361, 8
        %s363 = scalar_lea.vmem [#allocation2], %s362
        %p364 = scmp.lt.s32.totalorder %s24, 1
        %s365 = scalar_select %p364, %s24, 1
        %s366 = smul.addr %s365, 4
        %s367 = scalar_lea.vmem %s0, %s366
        %p368 = scmp.lt.s32.totalorder %s24, 1
        %s369 = scalar_select %p368, %s24, 1
        %s370 = smul.addr %s369, 4
        %s371 = scalar_lea.vmem %s1, %s370
        %v373 = vld [vmem:[%s367] sm:$0xf]
        %v374 = vld [vmem:[%s371] sm:$0xf]
        %v375 = vld [vmem:[%s2] sm:$0xf]
        %v376 = vld [vmem:[%s2 + $0x4] sm:$0xf]
        %v377 = vld [vmem:[%s2 + $0x8] sm:$0xf]
        %v378 = vld [vmem:[%s2 + $0xc] sm:$0xf]
        %v379 = vld [vmem:[%s3] sm:$0x1]
        %v381 = vlaneseq
        %v382 = vshrl.u32 %v381, 7
        %v383 = vsub.s32 0, %v382
        %v384 = vrot.slane %v379, %v383
        %v390 = vunpack.c.l.b16 %v375
        %v391 = vunpack.c.l.b16 %v376
        %v392 = vunpack.c.l.b16 %v377
        %v393 = vunpack.c.l.b16 %v378
        %v394 = vpack.c.b16 %v391, %v390
        %v395 = vpack.c.b16 %v393, %v392
        %vm398 = vcmask 261120
        %v400 = vsel %vm398, %v373, 0
        %402 = vmatprep.subr.bf16.mxu0 0
        %403 = vmatpush1.bf16.msra.mxu0 %v394
        %404 = vmatprep.subr.bf16.mxu0 0
        %405 = vmatpush1.bf16.msra.mxu0 %v395
        %406 = vmatprep.subr.bf16.mxu0 0
        %407 = vmatpush1.bf16.msra.mxu0 0
        %408 = vmatprep.subr.bf16.mxu0 0
        %409 = vmatpush1.bf16.msra.mxu0 0
        %410 = vmatprep.subr.bf16.mxu0 0
        %411 = vmatpush1.bf16.msra.mxu0 0
        %412 = vmatprep.subr.bf16.mxu0 0
        %413 = vmatpush1.bf16.msra.mxu0 0
        %414 = vmatprep.subr.bf16.mxu0 0
        %415 = vmatpush1.bf16.msra.mxu0 0
        %416 = vmatprep.subr.bf16.mxu0 0
        %417 = vmatpush1.bf16.msra.mxu0 0
        %418 = vmatprep.subr.bf16.mxu0 0
        %419 = vmatpush1.bf16.msra.mxu0 0
        %420 = vmatprep.subr.bf16.mxu0 0
        %421 = vmatpush1.bf16.msra.mxu0 0
        %422 = vmatprep.subr.bf16.mxu0 0
        %423 = vmatpush1.bf16.msra.mxu0 0
        %424 = vmatprep.subr.bf16.mxu0 0
        %425 = vmatpush1.bf16.msra.mxu0 0
        %426 = vmatprep.subr.bf16.mxu0 0
        %427 = vmatpush1.bf16.msra.mxu0 0
        %428 = vmatprep.subr.bf16.mxu0 0
        %429 = vmatpush1.bf16.msra.mxu0 0
        %430 = vmatprep.subr.bf16.mxu0 0
        %431 = vmatpush1.bf16.msra.mxu0 0
        %432 = vmatprep.subr.bf16.mxu0 0
        %433 = vmatpush1.bf16.msra.mxu0 0
        %434 = vmatprep.mubr.bf16.mxu0 0
        %435 = vmatmul.mubr.bf16.gmra.mrb[0].mxu0 %v400
        %v436 = vpop.f32.mrb[0].mxu0
        %v437 = vadd.f32 %v384, %v436
        %v438 = vpop.f32.mrb[0].mxu0
        %v439 = vpop.f32.mrb[0].mxu0
        %v440 = vpop.f32.mrb[0].mxu0
        %441 = vdwg.mxu0
        %v442 = vld [vmem:[%s4] sm:$0xf]
        %v443 = vld [vmem:[%s4 + $0x4] sm:$0xf]
        %v444 = vld [vmem:[%s4 + $0x8] sm:$0xf]
        %v445 = vld [vmem:[%s4 + $0xc] sm:$0xf]
        %v446 = vld [vmem:[%s5] sm:$0x1]
        %v448 = vlaneseq
        %v449 = vshrl.u32 %v448, 7
        %v450 = vsub.s32 0, %v449
        %v451 = vrot.slane %v446, %v450
        %v457 = vunpack.c.l.b16 %v442
        %v458 = vunpack.c.l.b16 %v443
        %v459 = vunpack.c.l.b16 %v444
        %v460 = vunpack.c.l.b16 %v445
        %v461 = vpack.c.b16 %v458, %v457
        %v462 = vpack.c.b16 %v460, %v459
        %v466 = vsel %vm398, %v374, 0
        %468 = vmatprep.subr.bf16.mxu0 0
        %469 = vmatpush1.bf16.msra.mxu0 %v461
        %470 = vmatprep.subr.bf16.mxu0 0
        %471 = vmatpush1.bf16.msra.mxu0 %v462
        %472 = vmatprep.subr.bf16.mxu0 0
        %473 = vmatpush1.bf16.msra.mxu0 0
        %474 = vmatprep.subr.bf16.mxu0 0
        %475 = vmatpush1.bf16.msra.mxu0 0
        %476 = vmatprep.subr.bf16.mxu0 0
        %477 = vmatpush1.bf16.msra.mxu0 0
        %478 = vmatprep.subr.bf16.mxu0 0
        %479 = vmatpush1.bf16.msra.mxu0 0
        %480 = vmatprep.subr.bf16.mxu0 0
        %481 = vmatpush1.bf16.msra.mxu0 0
        %482 = vmatprep.subr.bf16.mxu0 0
        %483 = vmatpush1.bf16.msra.mxu0 0
        %484 = vmatprep.subr.bf16.mxu0 0
        %485 = vmatpush1.bf16.msra.mxu0 0
        %486 = vmatprep.subr.bf16.mxu0 0
        %487 = vmatpush1.bf16.msra.mxu0 0
        %488 = vmatprep.subr.bf16.mxu0 0
        %489 = vmatpush1.bf16.msra.mxu0 0
        %490 = vmatprep.subr.bf16.mxu0 0
        %491 = vmatpush1.bf16.msra.mxu0 0
        %492 = vmatprep.subr.bf16.mxu0 0
        %493 = vmatpush1.bf16.msra.mxu0 0
        %494 = vmatprep.subr.bf16.mxu0 0
        %495 = vmatpush1.bf16.msra.mxu0 0
        %496 = vmatprep.subr.bf16.mxu0 0
        %497 = vmatpush1.bf16.msra.mxu0 0
        %498 = vmatprep.subr.bf16.mxu0 0
        %499 = vmatpush1.bf16.msra.mxu0 0
        %500 = vmatprep.mubr.bf16.mxu0 0
        %501 = vmatmul.mubr.bf16.gmra.mrb[0].mxu0 %v466
        %v502 = vpop.f32.mrb[0].mxu0
        %v503 = vadd.f32 %v451, %v502
        %v504 = vpop.f32.mrb[0].mxu0
        %v505 = vpop.f32.mrb[0].mxu0
        %v506 = vpop.f32.mrb[0].mxu0
        %507 = vdwg.mxu0
        %v508 = vld [vmem:[%s6] sm:$0xf]
        %v509 = vld [vmem:[%s6 + $0x4] sm:$0xf]
        %v510 = vld [vmem:[%s6 + $0x8] sm:$0xf]
        %v511 = vld [vmem:[%s6 + $0xc] sm:$0xf]
        %v512 = vld [vmem:[%s7] sm:$0x1]
        %v514 = vlaneseq
        %v515 = vshrl.u32 %v514, 7
        %v516 = vsub.s32 0, %v515
        %v517 = vrot.slane %v512, %v516
        %v523 = vunpack.c.l.b16 %v508
        %v524 = vunpack.c.l.b16 %v509
        %v525 = vunpack.c.l.b16 %v510
        %v526 = vunpack.c.l.b16 %v511
        %v527 = vpack.c.b16 %v524, %v523
        %v528 = vpack.c.b16 %v526, %v525
        %531 = vmatprep.subr.bf16.mxu0 0
        %532 = vmatpush1.bf16.msra.mxu0 %v527
        %533 = vmatprep.subr.bf16.mxu0 0
        %534 = vmatpush1.bf16.msra.mxu0 %v528
        %535 = vmatprep.subr.bf16.mxu0 0
        %536 = vmatpush1.bf16.msra.mxu0 0
        %537 = vmatprep.subr.bf16.mxu0 0
        %538 = vmatpush1.bf16.msra.mxu0 0
        %539 = vmatprep.subr.bf16.mxu0 0
        %540 = vmatpush1.bf16.msra.mxu0 0
        %541 = vmatprep.subr.bf16.mxu0 0
        %542 = vmatpush1.bf16.msra.mxu0 0
        %543 = vmatprep.subr.bf16.mxu0 0
        %544 = vmatpush1.bf16.msra.mxu0 0
        %545 = vmatprep.subr.bf16.mxu0 0
        %546 = vmatpush1.bf16.msra.mxu0 0
        %547 = vmatprep.subr.bf16.mxu0 0
        %548 = vmatpush1.bf16.msra.mxu0 0
        %549 = vmatprep.subr.bf16.mxu0 0
        %550 = vmatpush1.bf16.msra.mxu0 0
        %551 = vmatprep.subr.bf16.mxu0 0
        %552 = vmatpush1.bf16.msra.mxu0 0
        %553 = vmatprep.subr.bf16.mxu0 0
        %554 = vmatpush1.bf16.msra.mxu0 0
        %555 = vmatprep.subr.bf16.mxu0 0
        %556 = vmatpush1.bf16.msra.mxu0 0
        %557 = vmatprep.subr.bf16.mxu0 0
        %558 = vmatpush1.bf16.msra.mxu0 0
        %559 = vmatprep.subr.bf16.mxu0 0
        %560 = vmatpush1.bf16.msra.mxu0 0
        %561 = vmatprep.subr.bf16.mxu0 0
        %562 = vmatpush1.bf16.msra.mxu0 0
        %563 = vmatprep.mubr.bf16.mxu0 0
        %564 = vmatmul.mubr.bf16.gmra.mrb[0].mxu0 %v466
        %v565 = vpop.f32.mrb[0].mxu0
        %v566 = vadd.f32 %v517, %v565
        %v567 = vpop.f32.mrb[0].mxu0
        %v568 = vpop.f32.mrb[0].mxu0
        %v569 = vpop.f32.mrb[0].mxu0
        %570 = vdwg.mxu0
        %v571 = vmul.f32 %v437, 0.25
        %v572 = vpack.c.bf16 %v571, %v571
        %v573 = vpack.c.bf16 %v503, %v503
        %v574 = vpack.c.bf16 %v566, %v566
        %vm575 = vcmask 130048
        %v577 = vsel %vm575, %v572, 0
        %v580 = vsel %vm575, %v573, 0
        %582 = vmatprep.subr.bf16.mxu0 0
        %583 = vmatpush1.bf16.xpose.msra.mxu0 %v580
        %584 = vmatprep.subr.bf16.mxu0 0
        %585 = vmatpush1.bf16.xpose.msra.mxu0 0
        %586 = vmatprep.subr.bf16.mxu0 0
        %587 = vmatpush1.bf16.xpose.msra.mxu0 0
        %588 = vmatprep.subr.bf16.mxu0 0
        %589 = vmatpush1.bf16.xpose.msra.mxu0 0
        %590 = vmatprep.subr.bf16.mxu0 0
        %591 = vmatpush1.bf16.xpose.msra.mxu0 0
        %592 = vmatprep.subr.bf16.mxu0 0
        %593 = vmatpush1.bf16.xpose.msra.mxu0 0
        %594 = vmatprep.subr.bf16.mxu0 0
        %595 = vmatpush1.bf16.xpose.msra.mxu0 0
        %596 = vmatprep.subr.bf16.mxu0 0
        %597 = vmatpush1.bf16.xpose.msra.mxu0 0
        %598 = vmatprep.subr.bf16.mxu0 0
        %599 = vmatpush1.bf16.xpose.msra.mxu0 0
        %600 = vmatprep.subr.bf16.mxu0 0
        %601 = vmatpush1.bf16.xpose.msra.mxu0 0
        %602 = vmatprep.subr.bf16.mxu0 0
        %603 = vmatpush1.bf16.xpose.msra.mxu0 0
        %604 = vmatprep.subr.bf16.mxu0 0
        %605 = vmatpush1.bf16.xpose.msra.mxu0 0
        %606 = vmatprep.subr.bf16.mxu0 0
        %607 = vmatpush1.bf16.xpose.msra.mxu0 0
        %608 = vmatprep.subr.bf16.mxu0 0
        %609 = vmatpush1.bf16.xpose.msra.mxu0 0
        %610 = vmatprep.subr.bf16.mxu0 0
        %611 = vmatpush1.bf16.xpose.msra.mxu0 0
        %612 = vmatprep.subr.bf16.mxu0 0
        %613 = vmatpush1.bf16.xpose.msra.mxu0 0
        %614 = vmatprep.mubr.bf16.mxu0 0
        %615 = vmatmul.mubr.bf16.gmra.mrb[0].mxu0 %v577
        %v616 = vpop.f32.mrb[0].mxu0
        %v617 = vadd.f32 0.0, %v616
        %v618 = vpop.f32.mrb[0].mxu0
        %v619 = vpop.f32.mrb[0].mxu0
        %v620 = vpop.f32.mrb[0].mxu0
        %621 = vdwg.mxu0
        %vm622 = vcmask 64512
        %v623 = vsel %vm622, %v617, -inf
        %624 = vmax.xlane.f32.xlu0 %v623
        %v625 = vpop.xlane.xlu0 %624
        %v626 = vsub.f32 %v617, %v625
        %v627 = vmul.f32 %v626, 1.442695
        %v628 = vpow.pop %v627
        %v629 = vsel %vm622, %v628, 0.0
        %630 = vadd.xlane.f32.xlu0 %v629
        %v631 = vpop.xlane.xlu0 %630
        %v632 = vrcp.pop %v631
        %v633 = vmul.f32 %v628, %v632
        %v634 = vpack.c.bf16 %v633, %v633
        %v636 = vsel %vm622, %v634, 0
        %vm638 = vcmask 1043456
        %v640 = vsel %vm638, %v574, 0
        %642 = vmatprep.subr.bf16.mxu0 0
        %643 = vmatpush1.bf16.msra.mxu0 %v640
        %644 = vmatprep.subr.bf16.mxu0 0
        %645 = vmatpush1.bf16.msra.mxu0 0
        %646 = vmatprep.subr.bf16.mxu0 0
        %647 = vmatpush1.bf16.msra.mxu0 0
        %648 = vmatprep.subr.bf16.mxu0 0
        %649 = vmatpush1.bf16.msra.mxu0 0
        %650 = vmatprep.subr.bf16.mxu0 0
        %651 = vmatpush1.bf16.msra.mxu0 0
        %652 = vmatprep.subr.bf16.mxu0 0
        %653 = vmatpush1.bf16.msra.mxu0 0
        %654 = vmatprep.subr.bf16.mxu0 0
        %655 = vmatpush1.bf16.msra.mxu0 0
        %656 = vmatprep.subr.bf16.mxu0 0
        %657 = vmatpush1.bf16.msra.mxu0 0
        %658 = vmatprep.subr.bf16.mxu0 0
        %659 = vmatpush1.bf16.msra.mxu0 0
        %660 = vmatprep.subr.bf16.mxu0 0
        %661 = vmatpush1.bf16.msra.mxu0 0
        %662 = vmatprep.subr.bf16.mxu0 0
        %663 = vmatpush1.bf16.msra.mxu0 0
        %664 = vmatprep.subr.bf16.mxu0 0
        %665 = vmatpush1.bf16.msra.mxu0 0
        %666 = vmatprep.subr.bf16.mxu0 0
        %667 = vmatpush1.bf16.msra.mxu0 0
        %668 = vmatprep.subr.bf16.mxu0 0
        %669 = vmatpush1.bf16.msra.mxu0 0
        %670 = vmatprep.subr.bf16.mxu0 0
        %671 = vmatpush1.bf16.msra.mxu0 0
        %672 = vmatprep.subr.bf16.mxu0 0
        %673 = vmatpush1.bf16.msra.mxu0 0
        %674 = vmatprep.mubr.bf16.mxu0 0
        %675 = vmatmul.mubr.bf16.gmra.mrb[0].mxu0 %v636
        %v676 = vpop.f32.mrb[0].mxu0
        %v677 = vadd.f32 0.0, %v676
        %v678 = vpop.f32.mrb[0].mxu0
        %v679 = vpop.f32.mrb[0].mxu0
        %v680 = vpop.f32.mrb[0].mxu0
        %681 = vdwg.mxu0
        %683 = vrot.lane.b32.xlu0 %v572, 112
        %v684 = vpop.permute.xlu0 %683
        %686 = vrot.lane.b32.xlu0 %v573, 112
        %v687 = vpop.permute.xlu0 %686
        %v689 = vsel %vm575, %v684, 0
        %v692 = vsel %vm575, %v687, 0
        %694 = vmatprep.subr.bf16.mxu0 0
        %695 = vmatpush1.bf16.xpose.msra.mxu0 %v692
        %696 = vmatprep.subr.bf16.mxu0 0
        %697 = vmatpush1.bf16.xpose.msra.mxu0 0
        %698 = vmatprep.subr.bf16.mxu0 0
        %699 = vmatpush1.bf16.xpose.msra.mxu0 0
        %700 = vmatprep.subr.bf16.mxu0 0
        %701 = vmatpush1.bf16.xpose.msra.mxu0 0
        %702 = vmatprep.subr.bf16.mxu0 0
        %703 = vmatpush1.bf16.xpose.msra.mxu0 0
        %704 = vmatprep.subr.bf16.mxu0 0
        %705 = vmatpush1.bf16.xpose.msra.mxu0 0
        %706 = vmatprep.subr.bf16.mxu0 0
        %707 = vmatpush1.bf16.xpose.msra.mxu0 0
        %708 = vmatprep.subr.bf16.mxu0 0
        %709 = vmatpush1.bf16.xpose.msra.mxu0 0
        %710 = vmatprep.subr.bf16.mxu0 0
        %711 = vmatpush1.bf16.xpose.msra.mxu0 0
        %712 = vmatprep.subr.bf16.mxu0 0
        %713 = vmatpush1.bf16.xpose.msra.mxu0 0
        %714 = vmatprep.subr.bf16.mxu0 0
        %715 = vmatpush1.bf16.xpose.msra.mxu0 0
        %716 = vmatprep.subr.bf16.mxu0 0
        %717 = vmatpush1.bf16.xpose.msra.mxu0 0
        %718 = vmatprep.subr.bf16.mxu0 0
        %719 = vmatpush1.bf16.xpose.msra.mxu0 0
        %720 = vmatprep.subr.bf16.mxu0 0
        %721 = vmatpush1.bf16.xpose.msra.mxu0 0
        %722 = vmatprep.subr.bf16.mxu0 0
        %723 = vmatpush1.bf16.xpose.msra.mxu0 0
        %724 = vmatprep.subr.bf16.mxu0 0
        %725 = vmatpush1.bf16.xpose.msra.mxu0 0
        %726 = vmatprep.mubr.bf16.mxu0 0
        %727 = vmatmul.mubr.bf16.gmra.mrb[0].mxu0 %v689
        %v728 = vpop.f32.mrb[0].mxu0
        %v729 = vadd.f32 0.0, %v728
        %v730 = vpop.f32.mrb[0].mxu0
        %v731 = vpop.f32.mrb[0].mxu0
        %v732 = vpop.f32.mrb[0].mxu0
        %733 = vdwg.mxu0
        %v734 = vsel %vm622, %v729, -inf
        %735 = vmax.xlane.f32.xlu0 %v734
        %v736 = vpop.xlane.xlu0 %735
        %v737 = vsub.f32 %v729, %v736
        %v738 = vmul.f32 %v737, 1.442695
        %v739 = vpow.pop %v738
        %v740 = vsel %vm622, %v739, 0.0
        %741 = vadd.xlane.f32.xlu0 %v740
        %v742 = vpop.xlane.xlu0 %741
        %v743 = vrcp.pop %v742
        %v744 = vmul.f32 %v739, %v743
        %v745 = vpack.c.bf16 %v744, %v744
        %747 = vrot.lane.b32.xlu0 %v574, 112
        %v748 = vpop.permute.xlu0 %747
        %v750 = vsel %vm622, %v745, 0
        %v753 = vsel %vm638, %v748, 0
        %755 = vmatprep.subr.bf16.mxu0 0
        %756 = vmatpush1.bf16.msra.mxu0 %v753
        %757 = vmatprep.subr.bf16.mxu0 0
        %758 = vmatpush1.bf16.msra.mxu0 0
        %759 = vmatprep.subr.bf16.mxu0 0
        %760 = vmatpush1.bf16.msra.mxu0 0
        %761 = vmatprep.subr.bf16.mxu0 0
        %762 = vmatpush1.bf16.msra.mxu0 0
        %763 = vmatprep.subr.bf16.mxu0 0
        %764 = vmatpush1.bf16.msra.mxu0 0
        %765 = vmatprep.subr.bf16.mxu0 0
        %766 = vmatpush1.bf16.msra.mxu0 0
        %767 = vmatprep.subr.bf16.mxu0 0
        %768 = vmatpush1.bf16.msra.mxu0 0
        %769 = vmatprep.subr.bf16.mxu0 0
        %770 = vmatpush1.bf16.msra.mxu0 0
        %771 = vmatprep.subr.bf16.mxu0 0
        %772 = vmatpush1.bf16.msra.mxu0 0
        %773 = vmatprep.subr.bf16.mxu0 0
        %774 = vmatpush1.bf16.msra.mxu0 0
        %775 = vmatprep.subr.bf16.mxu0 0
        %776 = vmatpush1.bf16.msra.mxu0 0
        %777 = vmatprep.subr.bf16.mxu0 0
        %778 = vmatpush1.bf16.msra.mxu0 0
        %779 = vmatprep.subr.bf16.mxu0 0
        %780 = vmatpush1.bf16.msra.mxu0 0
        %781 = vmatprep.subr.bf16.mxu0 0
        %782 = vmatpush1.bf16.msra.mxu0 0
        %783 = vmatprep.subr.bf16.mxu0 0
        %784 = vmatpush1.bf16.msra.mxu0 0
        %785 = vmatprep.subr.bf16.mxu0 0
        %786 = vmatpush1.bf16.msra.mxu0 0
        %787 = vmatprep.mubr.bf16.mxu0 0
        %788 = vmatmul.mubr.bf16.gmra.mrb[0].mxu0 %v750
        %v789 = vpop.f32.mrb[0].mxu0
        %v790 = vadd.f32 0.0, %v789
        %v791 = vpop.f32.mrb[0].mxu0
        %v792 = vpop.f32.mrb[0].mxu0
        %v793 = vpop.f32.mrb[0].mxu0
        %794 = vdwg.mxu0
        %796 = vrot.lane.b32.xlu0 %v790, 16
        %v797 = vpop.permute.xlu0 %796
        %v799 = vsel %vm575, %v677, %v797
        %v800 = vpack.c.bf16 %v799, %v799
        %v801 = vld [vmem:[%s8] sm:$0xf]
        %v802 = vld [vmem:[%s8 + $0x4] sm:$0xf]
        %v803 = vld [vmem:[%s8 + $0x8] sm:$0xf]
        %v804 = vld [vmem:[%s8 + $0xc] sm:$0xf]
        %v805 = vld [vmem:[%s9] sm:$0x1]
        %v807 = vlaneseq
        %v808 = vshrl.u32 %v807, 7
        %v809 = vsub.s32 0, %v808
        %v810 = vrot.slane %v805, %v809
        %v816 = vunpack.c.l.b16 %v801
        %v817 = vunpack.c.l.b16 %v802
        %v818 = vunpack.c.l.b16 %v803
        %v819 = vunpack.c.l.b16 %v804
        %v820 = vpack.c.b16 %v817, %v816
        %v821 = vpack.c.b16 %v819, %v818
        %v825 = vsel %vm398, %v800, 0
        %827 = vmatprep.subr.bf16.mxu0 0
        %828 = vmatpush1.bf16.msra.mxu0 %v820
        %829 = vmatprep.subr.bf16.mxu0 0
        %830 = vmatpush1.bf16.msra.mxu0 %v821
        %831 = vmatprep.subr.bf16.mxu0 0
        %832 = vmatpush1.bf16.msra.mxu0 0
        %833 = vmatprep.subr.bf16.mxu0 0
        %834 = vmatpush1.bf16.msra.mxu0 0
        %835 = vmatprep.subr.bf16.mxu0 0
        %836 = vmatpush1.bf16.msra.mxu0 0
        %837 = vmatprep.subr.bf16.mxu0 0
        %838 = vmatpush1.bf16.msra.mxu0 0
        %839 = vmatprep.subr.bf16.mxu0 0
        %840 = vmatpush1.bf16.msra.mxu0 0
        %841 = vmatprep.subr.bf16.mxu0 0
        %842 = vmatpush1.bf16.msra.mxu0 0
        %843 = vmatprep.subr.bf16.mxu0 0
        %844 = vmatpush1.bf16.msra.mxu0 0
        %845 = vmatprep.subr.bf16.mxu0 0
        %846 = vmatpush1.bf16.msra.mxu0 0
        %847 = vmatprep.subr.bf16.mxu0 0
        %848 = vmatpush1.bf16.msra.mxu0 0
        %849 = vmatprep.subr.bf16.mxu0 0
        %850 = vmatpush1.bf16.msra.mxu0 0
        %851 = vmatprep.subr.bf16.mxu0 0
        %852 = vmatpush1.bf16.msra.mxu0 0
        %853 = vmatprep.subr.bf16.mxu0 0
        %854 = vmatpush1.bf16.msra.mxu0 0
        %855 = vmatprep.subr.bf16.mxu0 0
        %856 = vmatpush1.bf16.msra.mxu0 0
        %857 = vmatprep.subr.bf16.mxu0 0
        %858 = vmatpush1.bf16.msra.mxu0 0
        %859 = vmatprep.mubr.bf16.mxu0 0
        %860 = vmatmul.mubr.bf16.gmra.mrb[0].mxu0 %v825
        %v861 = vpop.f32.mrb[0].mxu0
        %v862 = vadd.f32 %v810, %v861
        %v863 = vpop.f32.mrb[0].mxu0
        %v864 = vpop.f32.mrb[0].mxu0
        %v865 = vpop.f32.mrb[0].mxu0
        %866 = vdwg.mxu0
        %867 = vst.msk [vmem:[%s363] sm:$0xff] %vm398, %v862
        %s868 = sand.u32 %s252, 1
        %s869 = scalar_lea.sflag [#allocation3], %s868
        %s870 = sand.u32 %s252, 1
        %s871 = smul.addr %s870, 8
        %s872 = scalar_lea.vmem [#allocation2], %s871
        // Predicated region
        $region61: #{multihead_attention_forward.1} parent=59 // pred_check
          %p873 = pneg %p262
        $region62: #{multihead_attention_forward.1} parent=59 // pred_check_branch
          %875 = sbr.rel (%p873) target = $region64
        $region63: #{multihead_attention_forward.1} parent=59 // pred_region
          %s877 = ssub.s32 128, 128
          %878 = vsyncadd %s869, %s877
          %s879 = smul.addr %s24, 128
          %s880 = scalar_lea.hbm %s10, %s879
          %s882 = sshll.u32 %s872, 4
          %s883 = int_to_ptr.vmem [resolvable:$true] %s882
          %885 = dma.vmem_to_hbm [thread:$0]  %s883, 128, %s880, %s869
        $region64: #{multihead_attention_forward.1} parent=59 // pred_fallthru
          _
      $region60: #{multihead_attention_forward.1} parent=5 // pred_fallthru
        _
      %p886 = scmp.le.s32.totalorder 2, %s19
      // Predicated region
      $region65: #{multihead_attention_forward.1} parent=5 // pred_check
        %p887 = pneg %p886
      $region66: #{multihead_attention_forward.1} parent=5 // pred_check_branch
        %889 = sbr.rel (%p887) target = $region68
      $region67: #{multihead_attention_forward.1} parent=5 // pred_region
        %s890 = ssub.s32 %s19, 2
        // Predicated region
        $region69: #{multihead_attention_forward.1} parent=67 // pred_check
          %p891 = pneg %p268
        $region70: #{multihead_attention_forward.1} parent=67 // pred_check_branch
          %893 = sbr.rel (%p891) target = $region72
        $region71: #{multihead_attention_forward.1} parent=67 // pred_region
          %s894 = sand.u32 %s253, 1
          %s895 = scalar_lea.sflag [#allocation3], %s894
          %s896 = sand.u32 %s253, 1
          %s897 = smul.addr %s896, 8
          %s898 = scalar_lea.vmem [#allocation2], %s897
          %899 = dma.done %s895, 128
        $region72: #{multihead_attention_forward.1} parent=67 // pred_fallthru
          _
      $region68: #{multihead_attention_forward.1} parent=5 // pred_fallthru
        _
    $region6: #{multihead_attention_forward.1} parent=1 // loop_footer
      %s23 = sadd.s32 1, %s19
    $region7: #{multihead_attention_forward.1} parent=1 // loop_footer_branch
      %18 = sbr.rel target = $region3
    $region8: #{multihead_attention_forward.1} parent=1 // loop_exit
      _
    %900 = vsyncpa [#allocation3], 1
    %s901 = scalar_lea.sflag [#allocation3], 1
    %902 = vsyncpa %s901, 1

</llo_original>
